<compile_context>
chip_gen: v6e
topology: v6e:2x2x1
jax: 0.10.0
libtpu: 0.0.40
codegen_flags: <defaults>
</compile_context>

<pallas_src>
import functools

import jax
import jax.numpy as jnp
from jax import lax
from jax.experimental import pallas as pl
from jax.experimental.pallas import tpu as pltpu

_LANE = 128
_SUBLANE = 8
_SLAB_W = 4 * _LANE                  # lane-dense slab width (multiple of 128)
_GRANULE = _SUBLANE * _SLAB_W        # pad flat length to a multiple of this
_BLOCK_BYTES = 2 * 1024 * 1024       # per-block VMEM budget (v5e-safe)
_PIPELINE_BYTES = 1 << 20            # above this, force >= 4 grid steps
_FUSE_BYTES = 2 * 1024 * 1024        # fuse atom+pair below this combined size


def _dropout_kernel(seed_ref, x_ref, o_ref, *, threshold_24, inv_keep):
    tm, n = x_ref.shape
    # Global flat element index (independent of the chosen tile size tm).
    row = lax.broadcasted_iota(jnp.int32, (tm, n), 0).astype(jnp.uint32)
    col = lax.broadcasted_iota(jnp.int32, (tm, n), 1).astype(jnp.uint32)
    base = pl.program_id(0).astype(jnp.uint32) * jnp.uint32(tm)
    idx = (base + row) * jnp.uint32(n) + col
    # Counter-based hash (lowbias32 finalizer), seeded -> 32 uniform bits/elem.
    h = idx ^ (seed_ref[0].astype(jnp.uint32) * jnp.uint32(0x9E3779B1))
    h = h ^ (h >> jnp.uint32(16))
    h = h * jnp.uint32(0x7FEB352D)
    h = h ^ (h >> jnp.uint32(15))
    h = h * jnp.uint32(0x846CA68B)
    h = h ^ (h >> jnp.uint32(16))
    # Integer threshold test on the top 24 bits (no float-uniform build).
    keep = (h >> jnp.uint32(8)).astype(jnp.int32) >= jnp.int32(threshold_24)
    x = x_ref[...]
    kept = x * jnp.asarray(inv_keep, dtype=x.dtype)   # compute in input dtype
    o_ref[...] = jnp.where(keep, kept, jnp.zeros_like(kept))


def _row_tile(rows, padded_bytes, itemsize):
    """Row tile: multiple of 8, block <= ~2 MiB, >= 4 steps for big inputs."""
    tm = (_BLOCK_BYTES // (_SLAB_W * itemsize)) // _SUBLANE * _SUBLANE
    tm = max(_SUBLANE, min(rows, tm))
    if padded_bytes > _PIPELINE_BYTES:
        cap = max(_SUBLANE, (rows // 4) // _SUBLANE * _SUBLANE)
        tm = min(tm, cap)
    return tm


def _pallas_dropout_flat(flat, prob, seed):
    """Inverted dropout on a 1-D array via one pallas_call over a lane-dense slab."""
    total = flat.size
    padded = pl.cdiv(total, _GRANULE) * _GRANULE
    if padded != total:
        flat = jnp.pad(flat, (0, padded - total))
    rows = padded // _SLAB_W
    x2 = flat.reshape(rows, _SLAB_W)
    itemsize = x2.dtype.itemsize

    tm = _row_tile(rows, padded * itemsize, itemsize)
    grid = (pl.cdiv(rows, tm),)
    seed_arr = jnp.asarray([seed], dtype=jnp.int32)

    kernel = functools.partial(
        _dropout_kernel,
        threshold_24=int(round(float(prob) * (1 << 24))),
        inv_keep=1.0 / (1.0 - float(prob)))

    out = pl.pallas_call(
        kernel,
        out_shape=jax.ShapeDtypeStruct((rows, _SLAB_W), x2.dtype),
        grid_spec=pltpu.PrefetchScalarGridSpec(
            num_scalar_prefetch=1,
            grid=grid,
            # index_maps receive the scalar-prefetch ref as a trailing arg.
            in_specs=[pl.BlockSpec((tm, _SLAB_W), lambda i, s: (i, 0))],
            out_specs=pl.BlockSpec((tm, _SLAB_W), lambda i, s: (i, 0)),
        ),
        compiler_params=pltpu.CompilerParams(
            dimension_semantics=("parallel",),
        ),
        cost_estimate=pl.CostEstimate(
            flops=3 * padded, transcendentals=0,
            bytes_accessed=2 * padded * itemsize),
    )(seed_arr, x2)

    out = out.reshape(-1)
    return out[:total] if padded != total else out


def weave_dropout(atom_input, pair_input, *, prob, update_pair,
                  seed=0, training=True):
    """Forward pass of WeaveDropout. Returns (atom_out, pair_out)."""
    if not training or prob <= 0.0:
        return atom_input, pair_input
    if prob >= 1.0:  # torch Dropout(p=1) zeroes everything
        pair_out = jnp.zeros_like(pair_input) if update_pair else pair_input
        return jnp.zeros_like(atom_input), pair_out

    same_dtype = atom_input.dtype == pair_input.dtype
    combined_bytes = (atom_input.size + pair_input.size) * atom_input.dtype.itemsize
    if update_pair and same_dtype and combined_bytes <= _FUSE_BYTES:
        # Fuse both dropouts into one launch (amortize fixed overhead).
        a_flat = atom_input.reshape(-1)
        p_flat = pair_input.reshape(-1)
        fused = jnp.concatenate([a_flat, p_flat])
        out = _pallas_dropout_flat(fused, prob, seed)
        na = a_flat.size
        return (out[:na].reshape(atom_input.shape),
                out[na:].reshape(pair_input.shape))

    atom_out = _pallas_dropout_flat(
        atom_input.reshape(-1), prob, seed).reshape(atom_input.shape)
    if update_pair:
        pair_out = _pallas_dropout_flat(
            pair_input.reshape(-1), prob, seed + 1000003).reshape(pair_input.shape)
    else:
        pair_out = pair_input
    return atom_out, pair_out


if __name__ == "__main__":
    key = jax.random.PRNGKey(0)
    k_atom, k_pair = jax.random.split(key)

    N_ATOMS, ATOM_DIM = 16, 128
    N_PAIRS, PAIR_DIM = 64, 128
    PROB = 0.5

    atom = jax.random.normal(k_atom, (N_ATOMS, ATOM_DIM), dtype=jnp.float32)
    pair = jax.random.normal(k_pair, (N_PAIRS, PAIR_DIM), dtype=jnp.float32)

    atom_out, pair_out = weave_dropout(atom, pair, prob=PROB,
                                       update_pair=True, seed=42)
    jax.block_until_ready((atom_out, pair_out))

    scale = 1.0 / (1.0 - PROB)

    def check_dropout(x, y):
        dropped = (y == 0.0)
        kept_ok = jnp.isclose(y, x * scale, atol=1e-5, rtol=1e-5)
        assert bool(jnp.all(dropped | kept_ok)), "output not in {0, x/(1-p)}"
        frac = float(jnp.mean(dropped.astype(jnp.float32)))
        assert 0.25 < frac < 0.75, f"drop fraction {frac} implausible for p={PROB}"

    check_dropout(atom, atom_out)
    check_dropout(pair, pair_out)

    # Determinism: same seed -> same mask.
    atom_out2, pair_out2 = weave_dropout(atom, pair, prob=PROB,
                                         update_pair=True, seed=42)
    assert bool(jnp.all(atom_out == atom_out2))
    assert bool(jnp.all(pair_out == pair_out2))

    # update_pair=False -> pair passes through untouched.
    _, pair_id = weave_dropout(atom, pair, prob=PROB, update_pair=False, seed=7)
    assert bool(jnp.all(pair_id == pair))

    # eval mode -> identity on both.
    a_eval, p_eval = weave_dropout(atom, pair, prob=PROB, update_pair=True,
                                   seed=7, training=False)
    assert bool(jnp.all(a_eval == atom)) and bool(jnp.all(p_eval == pair))

    # prob >= 1 -> everything dropped (matches torch Dropout(p=1)).
    a_zero, p_zero = weave_dropout(atom, pair, prob=1.0, update_pair=True, seed=7)
    assert bool(jnp.all(a_zero == 0.0)) and bool(jnp.all(p_zero == 0.0))

    print("KERNEL_OK")
</pallas_src>

<mosaic_0001>
module attributes {stable_mosaic.version = 11 : i64} {
  func.func @_dropout_kernel(%arg0: i32, %arg1: memref<1xi32, #tpu.memory_space<smem>>, %arg2: memref<24x512xf32, #tpu.memory_space<vmem>>, %arg3: memref<24x512xf32, #tpu.memory_space<vmem>>) attributes {dimension_semantics = [#tpu.dimension_semantics<parallel>], iteration_bounds = array<i64: 1>, scalar_prefetch = 1 : i64, scratch_operands = 0 : i64, tpu.core_type = #tpu.core_type<tc>, window_params = [{transform_indices = @transform_0, window_bounds = array<i64: 24, 512>}, {transform_indices = @transform_1, window_bounds = array<i64: 24, 512>}]} {
    %0 = tpu.iota {dimensions = array<i32: 0>} : vector<24x512xi32>
    %1 = tpu.iota {dimensions = array<i32: 1>} : vector<24x512xi32>
    %c24_i32 = arith.constant 24 : i32
    %2 = arith.muli %arg0, %c24_i32 : i32
    %3 = vector.broadcast %2 : i32 to vector<24x512xi32>
    %4 = arith.addi %3, %0 : vector<24x512xi32>
    %c512_i32 = arith.constant 512 : i32
    %5 = vector.broadcast %c512_i32 : i32 to vector<24x512xi32>
    %6 = arith.muli %4, %5 : vector<24x512xi32>
    %7 = arith.addi %6, %1 : vector<24x512xi32>
    %c0 = arith.constant 0 : index
    %8 = memref.load %arg1[%c0] : memref<1xi32, #tpu.memory_space<smem>>
    %c-1640531535_i32 = arith.constant -1640531535 : i32
    %9 = arith.muli %8, %c-1640531535_i32 : i32
    %10 = vector.broadcast %9 : i32 to vector<24x512xi32>
    %11 = arith.xori %7, %10 : vector<24x512xi32>
    %c16_i32 = arith.constant 16 : i32
    %12 = vector.broadcast %c16_i32 : i32 to vector<24x512xi32>
    %13 = arith.shrui %11, %12 : vector<24x512xi32>
    %14 = arith.xori %11, %13 : vector<24x512xi32>
    %c2146121005_i32 = arith.constant 2146121005 : i32
    %15 = vector.broadcast %c2146121005_i32 : i32 to vector<24x512xi32>
    %16 = arith.muli %14, %15 : vector<24x512xi32>
    %c15_i32 = arith.constant 15 : i32
    %17 = vector.broadcast %c15_i32 : i32 to vector<24x512xi32>
    %18 = arith.shrui %16, %17 : vector<24x512xi32>
    %19 = arith.xori %16, %18 : vector<24x512xi32>
    %c-2073254261_i32 = arith.constant -2073254261 : i32
    %20 = vector.broadcast %c-2073254261_i32 : i32 to vector<24x512xi32>
    %21 = arith.muli %19, %20 : vector<24x512xi32>
    %c16_i32_0 = arith.constant 16 : i32
    %22 = vector.broadcast %c16_i32_0 : i32 to vector<24x512xi32>
    %23 = arith.shrui %21, %22 : vector<24x512xi32>
    %24 = arith.xori %21, %23 : vector<24x512xi32>
    %c8_i32 = arith.constant 8 : i32
    %25 = vector.broadcast %c8_i32 : i32 to vector<24x512xi32>
    %26 = arith.shrui %24, %25 : vector<24x512xi32>
    %c8388608_i32 = arith.constant 8388608 : i32
    %27 = vector.broadcast %c8388608_i32 : i32 to vector<24x512xi32>
    %28 = arith.cmpi sge, %26, %27 : vector<24x512xi32>
    %c0_1 = arith.constant 0 : index
    %c0_2 = arith.constant 0 : index
    %29 = vector.load %arg2[%c0_1, %c0_2] : memref<24x512xf32, #tpu.memory_space<vmem>>, vector<24x512xf32>
    %cst = arith.constant 2.000000e+00 : f32
    %30 = vector.broadcast %cst : f32 to vector<24x512xf32>
    %31 = arith.mulf %29, %30 : vector<24x512xf32>
    %cst_3 = arith.constant 0.000000e+00 : f32
    %32 = vector.broadcast %cst_3 : f32 to vector<24x512xf32>
    %33 = arith.select %28, %31, %32 : vector<24x512xi1>, vector<24x512xf32>
    %c0_4 = arith.constant 0 : index
    %c0_5 = arith.constant 0 : index
    %34 = vector.load %arg3[%c0_4, %c0_5] : memref<24x512xf32, #tpu.memory_space<vmem>>, vector<24x512xf32>
    tpu.vector_store %arg3[%c0_4, %c0_5], %33 {strides = array<i32>} : memref<24x512xf32, #tpu.memory_space<vmem>>, vector<24x512xf32>,
    return
  }
  func.func @transform_0(%arg0: i32, %arg1: memref<1xi32, #tpu.memory_space<smem>>) -> (i32, i32) {
    %c0_i32 = arith.constant 0 : i32
    %c0_i32_0 = arith.constant 0 : i32
    return %arg0, %c0_i32 : i32, i32
  }
  func.func @transform_1(%arg0: i32, %arg1: memref<1xi32, #tpu.memory_space<smem>>) -> (i32, i32) {
    %c0_i32 = arith.constant 0 : i32
    %c0_i32_0 = arith.constant 0 : i32
    return %arg0, %c0_i32 : i32, i32
  }
}

</mosaic_0001>

<llo_original>
// kernel: tpu_custom_call.1
$region0: #{tpu_custom_call.1}
  #allocation0 [shape = 'u32[]', space=smem, size = 0x4, offset = 0x4, fixed_abs, tag = 'smem constant byte address 0x4 - core index']
  #allocation1 [shape = 'u32[144,128]{1,0:T(1,128)}', space=vmem, size = 0x12000, scoped, tag = 'internal scratch']
  #allocation2 [shape = 's32[1]{0}', space=sflag, size = 0x4, scoped, tag = 'scoped memory for tpu_custom_call.1']
  #allocation3 [shape = 's32[1]{0:T(128)S(6)}', space=smem, size = 0x200, scoped, tag = 'prefetched SMEM operand 0']
  %s0 = inlined_call_operand.<no memory space> [shape: s32[1], index: 0, kind: input, shape index: {}]
  %s1 = inlined_call_operand.hbm [shape: f32[24,512], index: 1, kind: input, shape index: {}]
  %s2 = inlined_call_operand.hbm [shape: f32[24,512], index: 2, kind: output, shape index: {}]
  %s3 = sld [smem:[#allocation0]]
  $region18: #{tpu_custom_call.1} parent=0
    _
  %s5 = ssub.s32 1, %s3
  %s6 = scalar_select 0, %s5, %s3
  %7 = sst [smem:[#allocation3]] %s0
  $region1: #{tpu_custom_call.1} parent=0
    #allocation4 [shape = 'u8[49152]{0}', space=vmem, size = 0xc000, scoped, tag = 'input window, operand 1, single buffered']
    #allocation5 [shape = 's32[1]{0}', space=sflag, size = 0x4, scoped, tag = 'scoped memory for tpu_custom_call.1']
    #allocation6 [shape = 's32[1]{0}', space=sflag, size = 0x4, scoped, tag = 'scoped memory for tpu_custom_call.1']
    #allocation7 [shape = 'u8[49152]{0}', space=vmem, size = 0xc000, scoped, tag = 'output window, operand 0, single buffered']
    %8 = vsyncpa [#allocation5], 0
    %9 = vsyncpa [#allocation6], 0
    // Predicated region
    $region2: #{tpu_custom_call.1} parent=1 // pred_check
      _
    $region3: #{tpu_custom_call.1} parent=1 // pred_check_branch
      %11 = sbr.rel (0) target = $region5
    $region4: #{tpu_custom_call.1} parent=1 // pred_region
      %s13 = ssub.s32 1536, 1536
      %14 = vsyncadd [#allocation5], %s13
      %s15 = sshll.u32 [#allocation4], 4
      %s16 = int_to_ptr.vmem [resolvable:$true] %s15
      %21 = dma.hbm_to_vmem [thread:$0]  %s1, 1536, %s16, [#allocation5], 512, 512, 32
    $region5: #{tpu_custom_call.1} parent=1 // pred_fallthru
      _
    // Predicated region
    $region6: #{tpu_custom_call.1} parent=1 // pred_check
      _
    $region7: #{tpu_custom_call.1} parent=1 // pred_check_branch
      %23 = sbr.rel (0) target = $region9
    $region8: #{tpu_custom_call.1} parent=1 // pred_region
      %24 = dma.done [#allocation5], 1536
    $region9: #{tpu_custom_call.1} parent=1 // pred_fallthru
      _
    %v25 = vlaneseq
    %v26 = vshrl.u32 %v25, 7
    %v27 = vadd.s32 %v26, 8
    %v28 = vadd.s32 %v26, 16
    %v29 = vlaneseq
    %v30 = vand.u32 %v29, 127
    %v31 = vadd.s32 %v30, 128
    %v32 = vadd.s32 %v30, 256
    %v33 = vadd.s32 %v30, 384
    %s34 = smul.u32 0, 24
    %v35 = vstv %s34
    %v36 = vadd.s32 %v35, %v26
    %v37 = vadd.s32 %v35, %v27
    %v38 = vadd.s32 %v35, %v28
    %v39 = vmul.u32 %v36, 512
    %v40 = vmul.u32 %v37, 512
    %v41 = vmul.u32 %v38, 512
    %v42 = vadd.s32 %v39, %v30
    %v43 = vadd.s32 %v39, %v31
    %v44 = vadd.s32 %v39, %v32
    %v45 = vadd.s32 %v39, %v33
    %v46 = vadd.s32 %v40, %v30
    %v47 = vadd.s32 %v40, %v31
    %v48 = vadd.s32 %v40, %v32
    %v49 = vadd.s32 %v40, %v33
    %v50 = vadd.s32 %v41, %v30
    %v51 = vadd.s32 %v41, %v31
    %v52 = vadd.s32 %v41, %v32
    %v53 = vadd.s32 %v41, %v33
    %s54 = sld [smem:[#allocation3]]
    %s55 = smul.u32 %s54, 2654435761
    %v56 = vstv %s55
    %v57 = vxor.u32 %v42, %v56
    %v58 = vxor.u32 %v43, %v56
    %v59 = vxor.u32 %v44, %v56
    %v60 = vxor.u32 %v45, %v56
    %v61 = vxor.u32 %v46, %v56
    %v62 = vxor.u32 %v47, %v56
    %v63 = vxor.u32 %v48, %v56
    %v64 = vxor.u32 %v49, %v56
    %v65 = vxor.u32 %v50, %v56
    %v66 = vxor.u32 %v51, %v56
    %v67 = vxor.u32 %v52, %v56
    %v68 = vxor.u32 %v53, %v56
    %v69 = vshrl.u32 %v57, 16
    %v70 = vshrl.u32 %v58, 16
    %v71 = vshrl.u32 %v59, 16
    %v72 = vshrl.u32 %v60, 16
    %v73 = vshrl.u32 %v61, 16
    %v74 = vshrl.u32 %v62, 16
    %v75 = vshrl.u32 %v63, 16
    %v76 = vshrl.u32 %v64, 16
    %v77 = vshrl.u32 %v65, 16
    %v78 = vshrl.u32 %v66, 16
    %v79 = vshrl.u32 %v67, 16
    %v80 = vshrl.u32 %v68, 16
    %v81 = vxor.u32 %v57, %v69
    %v82 = vxor.u32 %v58, %v70
    %v83 = vxor.u32 %v59, %v71
    %v84 = vxor.u32 %v60, %v72
    %v85 = vxor.u32 %v61, %v73
    %v86 = vxor.u32 %v62, %v74
    %v87 = vxor.u32 %v63, %v75
    %v88 = vxor.u32 %v64, %v76
    %v89 = vxor.u32 %v65, %v77
    %v90 = vxor.u32 %v66, %v78
    %v91 = vxor.u32 %v67, %v79
    %v92 = vxor.u32 %v68, %v80
    %v93 = vmul.u32 %v81, 2146121005
    %v94 = vmul.u32 %v82, 2146121005
    %v95 = vmul.u32 %v83, 2146121005
    %v96 = vmul.u32 %v84, 2146121005
    %v97 = vmul.u32 %v85, 2146121005
    %v98 = vmul.u32 %v86, 2146121005
    %v99 = vmul.u32 %v87, 2146121005
    %v100 = vmul.u32 %v88, 2146121005
    %v101 = vmul.u32 %v89, 2146121005
    %v102 = vmul.u32 %v90, 2146121005
    %v103 = vmul.u32 %v91, 2146121005
    %v104 = vmul.u32 %v92, 2146121005
    %v105 = vshrl.u32 %v93, 15
    %v106 = vshrl.u32 %v94, 15
    %v107 = vshrl.u32 %v95, 15
    %v108 = vshrl.u32 %v96, 15
    %v109 = vshrl.u32 %v97, 15
    %v110 = vshrl.u32 %v98, 15
    %v111 = vshrl.u32 %v99, 15
    %v112 = vshrl.u32 %v100, 15
    %v113 = vshrl.u32 %v101, 15
    %v114 = vshrl.u32 %v102, 15
    %v115 = vshrl.u32 %v103, 15
    %v116 = vshrl.u32 %v104, 15
    %v117 = vxor.u32 %v93, %v105
    %v118 = vxor.u32 %v94, %v106
    %v119 = vxor.u32 %v95, %v107
    %v120 = vxor.u32 %v96, %v108
    %v121 = vxor.u32 %v97, %v109
    %v122 = vxor.u32 %v98, %v110
    %v123 = vxor.u32 %v99, %v111
    %v124 = vxor.u32 %v100, %v112
    %v125 = vxor.u32 %v101, %v113
    %v126 = vxor.u32 %v102, %v114
    %v127 = vxor.u32 %v103, %v115
    %v128 = vxor.u32 %v104, %v116
    %v129 = vmul.u32 %v117, 2221713035
    %v130 = vmul.u32 %v118, 2221713035
    %v131 = vmul.u32 %v119, 2221713035
    %v132 = vmul.u32 %v120, 2221713035
    %v133 = vmul.u32 %v121, 2221713035
    %v134 = vmul.u32 %v122, 2221713035
    %v135 = vmul.u32 %v123, 2221713035
    %v136 = vmul.u32 %v124, 2221713035
    %v137 = vmul.u32 %v125, 2221713035
    %v138 = vmul.u32 %v126, 2221713035
    %v139 = vmul.u32 %v127, 2221713035
    %v140 = vmul.u32 %v128, 2221713035
    %v141 = vshrl.u32 %v129, 16
    %v142 = vshrl.u32 %v130, 16
    %v143 = vshrl.u32 %v131, 16
    %v144 = vshrl.u32 %v132, 16
    %v145 = vshrl.u32 %v133, 16
    %v146 = vshrl.u32 %v134, 16
    %v147 = vshrl.u32 %v135, 16
    %v148 = vshrl.u32 %v136, 16
    %v149 = vshrl.u32 %v137, 16
    %v150 = vshrl.u32 %v138, 16
    %v151 = vshrl.u32 %v139, 16
    %v152 = vshrl.u32 %v140, 16
    %v153 = vxor.u32 %v129, %v141
    %v154 = vxor.u32 %v130, %v142
    %v155 = vxor.u32 %v131, %v143
    %v156 = vxor.u32 %v132, %v144
    %v157 = vxor.u32 %v133, %v145
    %v158 = vxor.u32 %v134, %v146
    %v159 = vxor.u32 %v135, %v147
    %v160 = vxor.u32 %v136, %v148
    %v161 = vxor.u32 %v137, %v149
    %v162 = vxor.u32 %v138, %v150
    %v163 = vxor.u32 %v139, %v151
    %v164 = vxor.u32 %v140, %v152
    %v165 = vshrl.u32 %v153, 8
    %v166 = vshrl.u32 %v154, 8
    %v167 = vshrl.u32 %v155, 8
    %v168 = vshrl.u32 %v156, 8
    %v169 = vshrl.u32 %v157, 8
    %v170 = vshrl.u32 %v158, 8
    %v171 = vshrl.u32 %v159, 8
    %v172 = vshrl.u32 %v160, 8
    %v173 = vshrl.u32 %v161, 8
    %v174 = vshrl.u32 %v162, 8
    %v175 = vshrl.u32 %v163, 8
    %v176 = vshrl.u32 %v164, 8
    %vm177 = vcmp.ge.s32.totalorder %v165, 8388608
    %vm178 = vcmp.ge.s32.totalorder %v166, 8388608
    %vm179 = vcmp.ge.s32.totalorder %v167, 8388608
    %vm180 = vcmp.ge.s32.totalorder %v168, 8388608
    %vm181 = vcmp.ge.s32.totalorder %v169, 8388608
    %vm182 = vcmp.ge.s32.totalorder %v170, 8388608
    %vm183 = vcmp.ge.s32.totalorder %v171, 8388608
    %vm184 = vcmp.ge.s32.totalorder %v172, 8388608
    %vm185 = vcmp.ge.s32.totalorder %v173, 8388608
    %vm186 = vcmp.ge.s32.totalorder %v174, 8388608
    %vm187 = vcmp.ge.s32.totalorder %v175, 8388608
    %vm188 = vcmp.ge.s32.totalorder %v176, 8388608
    %v189 = vld [vmem:[#allocation4] sm:$0xff]
    %v190 = vld [vmem:[#allocation4 + $0x8] sm:$0xff]
    %v191 = vld [vmem:[#allocation4 + $0x10] sm:$0xff]
    %v192 = vld [vmem:[#allocation4 + $0x18] sm:$0xff]
    %v193 = vld [vmem:[#allocation4 + $0x20] sm:$0xff]
    %v194 = vld [vmem:[#allocation4 + $0x28] sm:$0xff]
    %v195 = vld [vmem:[#allocation4 + $0x30] sm:$0xff]
    %v196 = vld [vmem:[#allocation4 + $0x38] sm:$0xff]
    %v197 = vld [vmem:[#allocation4 + $0x40] sm:$0xff]
    %v198 = vld [vmem:[#allocation4 + $0x48] sm:$0xff]
    %v199 = vld [vmem:[#allocation4 + $0x50] sm:$0xff]
    %v200 = vld [vmem:[#allocation4 + $0x58] sm:$0xff]
    %v201 = vmul.f32 %v189, 2.0
    %v202 = vmul.f32 %v190, 2.0
    %v203 = vmul.f32 %v191, 2.0
    %v204 = vmul.f32 %v192, 2.0
    %v205 = vmul.f32 %v193, 2.0
    %v206 = vmul.f32 %v194, 2.0
    %v207 = vmul.f32 %v195, 2.0
    %v208 = vmul.f32 %v196, 2.0
    %v209 = vmul.f32 %v197, 2.0
    %v210 = vmul.f32 %v198, 2.0
    %v211 = vmul.f32 %v199, 2.0
    %v212 = vmul.f32 %v200, 2.0
    %v213 = vsel %vm177, %v201, 0.0
    %v214 = vsel %vm178, %v202, 0.0
    %v215 = vsel %vm179, %v203, 0.0
    %v216 = vsel %vm180, %v204, 0.0
    %v217 = vsel %vm181, %v205, 0.0
    %v218 = vsel %vm182, %v206, 0.0
    %v219 = vsel %vm183, %v207, 0.0
    %v220 = vsel %vm184, %v208, 0.0
    %v221 = vsel %vm185, %v209, 0.0
    %v222 = vsel %vm186, %v210, 0.0
    %v223 = vsel %vm187, %v211, 0.0
    %v224 = vsel %vm188, %v212, 0.0
    %225 = vst [vmem:[#allocation7] sm:$0xff] %v213
    %226 = vst [vmem:[#allocation7 + $0x8] sm:$0xff] %v214
    %227 = vst [vmem:[#allocation7 + $0x10] sm:$0xff] %v215
    %228 = vst [vmem:[#allocation7 + $0x18] sm:$0xff] %v216
    %229 = vst [vmem:[#allocation7 + $0x20] sm:$0xff] %v217
    %230 = vst [vmem:[#allocation7 + $0x28] sm:$0xff] %v218
    %231 = vst [vmem:[#allocation7 + $0x30] sm:$0xff] %v219
    %232 = vst [vmem:[#allocation7 + $0x38] sm:$0xff] %v220
    %233 = vst [vmem:[#allocation7 + $0x40] sm:$0xff] %v221
    %234 = vst [vmem:[#allocation7 + $0x48] sm:$0xff] %v222
    %235 = vst [vmem:[#allocation7 + $0x50] sm:$0xff] %v223
    %236 = vst [vmem:[#allocation7 + $0x58] sm:$0xff] %v224
    // Predicated region
    $region10: #{tpu_custom_call.1} parent=1 // pred_check
      _
    $region11: #{tpu_custom_call.1} parent=1 // pred_check_branch
      %238 = sbr.rel (0) target = $region13
    $region12: #{tpu_custom_call.1} parent=1 // pred_region
      %s240 = ssub.s32 1536, 1536
      %241 = vsyncadd [#allocation6], %s240
      %s242 = sshll.u32 [#allocation7], 4
      %s243 = int_to_ptr.vmem [resolvable:$true] %s242
      %248 = dma.vmem_to_hbm [thread:$0]  %s243, 1536, %s2, [#allocation6], 512, 512, 32
    $region13: #{tpu_custom_call.1} parent=1 // pred_fallthru
      _
    // Predicated region
    $region14: #{tpu_custom_call.1} parent=1 // pred_check
      _
    $region15: #{tpu_custom_call.1} parent=1 // pred_check_branch
      %250 = sbr.rel (0) target = $region17
    $region16: #{tpu_custom_call.1} parent=1 // pred_region
      %251 = dma.done [#allocation6], 1536
    $region17: #{tpu_custom_call.1} parent=1 // pred_fallthru
      _
    %252 = vsyncpa [#allocation5], 1
    %253 = vsyncpa [#allocation6], 1

</llo_original>
